<compile_context>
chip_gen: v5e
topology: v5e:2x2
jax: 0.10.0
libtpu: 0.0.40
codegen_flags: <defaults>
</compile_context>

<pallas_src>
import jax
import jax.numpy as jnp
from jax import lax
from jax.experimental import pallas as pl
from jax.experimental.pallas import tpu as pltpu

MAX_SEQ_LENGTH = 128
EMBED_DIM = 32
PADDING_IDX = 1
LENGTH_OFFSET = (MAX_SEQ_LENGTH + 1) // 2  # 64


def _round_up(x, m):
    return ((x + m - 1) // m) * m


def _cdiv(a, b):
    return -(-a // b)


# ---------------------------------------------------------------------------
# Kernels
# ---------------------------------------------------------------------------
def _fused_kernel(nonpad_ref, enc_ref, w_ref, pred_ref, acc_ref, cnt_ref):
    """Streamed masked-sum over T + fused linear / argmax / clip epilogue.

    nonpad_ref: (tT, B, 1) f32  1.0 = real token (layout-aligned with enc)
    enc_ref   : (tT, B, C) f32  encoder-feature tile (streamed over T)
    w_ref     : (L, C)     f32  length-embedding table (block index constant)
    pred_ref  : (1, B)     i32  pred_length_tgt
    acc_ref   : (B, C)     f32  masked-sum accumulator (VMEM scratch)
    cnt_ref   : (B, 1)     f32  non-pad count accumulator (VMEM scratch)
    """
    t = pl.program_id(0)

    @pl.when(t == 0)
    def _():
        acc_ref[...] = jnp.zeros_like(acc_ref)
        cnt_ref[...] = jnp.zeros_like(cnt_ref)

    nonpad = nonpad_ref[...]                                        # (tT, B, 1)
    cnt_ref[...] += jnp.sum(nonpad, axis=0)                         # (B, 1)
    acc_ref[...] += jnp.sum(enc_ref[...] * nonpad, axis=0)          # (B, C)

    @pl.when(t == pl.num_programs(0) - 1)
    def _():
        acc = acc_ref[...]                                          # (B, C)
        # argmax is invariant to a positive per-row scale, so the 1/cnt divide
        # is skipped on the logits path; cnt is only needed for src_lens.
        logits = lax.dot_general(acc, w_ref[...],
                                 dimension_numbers=(((1,), (1,)), ((), ())),
                                 preferred_element_type=jnp.float32)  # (B, L)
        L = logits.shape[-1]
        max_val = jnp.max(logits, axis=-1, keepdims=True)             # (B, 1)
        col = lax.broadcasted_iota(jnp.int32, logits.shape, 1)        # (B, L)
        pred_off = jnp.min(jnp.where(logits >= max_val, col, L),
                           axis=-1, keepdims=True)                    # (B, 1) i32
        src_lens = cnt_ref[...].astype(jnp.int32)                     # (B, 1)
        pred = jnp.clip(pred_off - LENGTH_OFFSET + src_lens,
                        2, MAX_SEQ_LENGTH)                            # (B, 1)
        pred_ref[...] = pred.T                                        # (1, B)


def _partial_pool_kernel(nonpad_ref, enc_ref, acc_ref, cnt_ref):
    """Per-split masked-sum partials.  Grid axis 0 = split ("parallel"),
    grid axis 1 = T tiles ("arbitrary").  Output blocks are resident over T."""
    t = pl.program_id(1)

    @pl.when(t == 0)
    def _():
        acc_ref[...] = jnp.zeros_like(acc_ref)
        cnt_ref[...] = jnp.zeros_like(cnt_ref)

    nonpad = nonpad_ref[...]                                               # (tT, B, 1)
    cnt_ref[...] += jnp.sum(nonpad, axis=0, keepdims=True)                 # (1, B, 1)
    acc_ref[...] += jnp.sum(enc_ref[...] * nonpad, axis=0, keepdims=True)  # (1, B, C)


# ---------------------------------------------------------------------------
# Wrapper
# ---------------------------------------------------------------------------
def _vmem_plan(device_kind):
    dk = device_kind.lower()
    if "v7" in dk or "7x" in dk:
        # 64 MiB physical VMEM per TensorCore: cap below it, smaller enc target.
        return 48 * (1 << 20), 2 * (1 << 20)
    # v5e / v6e: 128 MiB physical VMEM; bigger tiles amortize fixed per-step cost.
    return 100 * (1 << 20), 4 * (1 << 20)


def length_predictor_forward(enc_feats, src_masks, length_emb_weight,
                             tgt_tokens=None, *, t_tile=None, num_splits=None):
    """enc_feats (T,B,C) f32, src_masks (B,T) bool (True=pad), tgt_tokens (B,S) i32."""
    T, B, C = enc_feats.shape
    L = length_emb_weight.shape[0]

    device_kind = jax.devices()[0].device_kind
    vmem_cap, enc_target_bytes = _vmem_plan(device_kind)
    if num_splits is None:
        dk = device_kind.lower()
        num_splits = 2 if ("v7" in dk or "7x" in dk) else 1   # v7x: 2 TensorCores
    num_splits = max(1, int(num_splits))

    # Padded footprints: second-to-last block dim rounds to 8, last to 128.
    pB_sub = _round_up(B, 8)
    pC = _round_up(C, 128)
    pL = _round_up(L, 8)

    T_per_split = _cdiv(T, num_splits)
    if t_tile is None:
        per_row_bytes = (pB_sub * pC + pB_sub * 128) * 4       # enc row + mask row
        budget_rows = max(8, int((vmem_cap * 3 // 4) // (2 * per_row_bytes)))
        target_rows = max(8, int(enc_target_bytes // (pB_sub * pC * 4)))
        t_tile = min(target_rows, budget_rows)
    t_tile = max(8, min(int(t_tile), _round_up(T_per_split, 8)))
    t_tile = _round_up(t_tile, 8)

    nT = _cdiv(T_per_split, t_tile)
    T_padded = num_splits * nT * t_tile

    # Single time-major f32 mask copy, layout-aligned with enc: (T, B, 1).
    nonpad = (~src_masks).astype(jnp.float32).T[:, :, None]     # (T, B, 1)
    if T_padded != T:
        pad = T_padded - T                                      # padded rows = 0.0
        enc_feats = jnp.pad(enc_feats, ((0, pad), (0, 0), (0, 0)))
        nonpad = jnp.pad(nonpad, ((0, pad), (0, 0), (0, 0)))

    # Padded-footprint VMEM accounting (double-buffered inputs + residents + scratch).
    enc_tile_bytes = t_tile * pB_sub * pC * 4
    mask_tile_bytes = t_tile * pB_sub * 128 * 4
    weight_bytes = pL * pC * 4
    scratch_bytes = (pB_sub * pC + pB_sub * 128) * 4
    out_bytes = 8 * _round_up(B, 128) * 4 + pB_sub * pC * 4 + pB_sub * 128 * 4
    needed = (2 * (enc_tile_bytes + mask_tile_bytes)
              + 2 * weight_bytes + 2 * out_bytes + scratch_bytes)
    vmem_limit = int(min(vmem_cap, max(needed + (4 << 20), 16 << 20)))

    cost = pl.CostEstimate(
        flops=2 * T_padded * B * C + 2 * B * C * L,
        transcendentals=0,
        bytes_accessed=4 * (T_padded * B * (C + 1) + L * C + B),
    )

    if num_splits == 1:
        pred = pl.pallas_call(
            _fused_kernel,
            out_shape=jax.ShapeDtypeStruct((1, B), jnp.int32),
            grid_spec=pltpu.PrefetchScalarGridSpec(
                num_scalar_prefetch=0,
                grid=(nT,),
                in_specs=[
                    pl.BlockSpec((t_tile, B, 1), lambda t: (t, 0, 0)),   # mask tile
                    pl.BlockSpec((t_tile, B, C), lambda t: (t, 0, 0)),   # enc tile
                    pl.BlockSpec((L, C), lambda t: (0, 0)),              # weight
                ],
                out_specs=pl.BlockSpec((1, B), lambda t: (0, 0)),
                scratch_shapes=[pltpu.VMEM((B, C), jnp.float32),
                                pltpu.VMEM((B, 1), jnp.float32)],
            ),
            compiler_params=pltpu.CompilerParams(
                dimension_semantics=("arbitrary",),      # T is a reduction axis
                vmem_limit_bytes=vmem_limit,
            ),
            cost_estimate=cost,
        )(nonpad, enc_feats, length_emb_weight)
        pred = pred[0]                                                   # (B,)
    else:
        acc_parts, cnt_parts = pl.pallas_call(
            _partial_pool_kernel,
            out_shape=(jax.ShapeDtypeStruct((num_splits, B, C), jnp.float32),
                       jax.ShapeDtypeStruct((num_splits, B, 1), jnp.float32)),
            grid_spec=pltpu.PrefetchScalarGridSpec(
                num_scalar_prefetch=0,
                grid=(num_splits, nT),
                in_specs=[
                    pl.BlockSpec((t_tile, B, 1), lambda s, t: (s * nT + t, 0, 0)),
                    pl.BlockSpec((t_tile, B, C), lambda s, t: (s * nT + t, 0, 0)),
                ],
                out_specs=[
                    pl.BlockSpec((1, B, C), lambda s, t: (s, 0, 0)),
                    pl.BlockSpec((1, B, 1), lambda s, t: (s, 0, 0)),
                ],
            ),
            compiler_params=pltpu.CompilerParams(
                dimension_semantics=("parallel", "arbitrary"),
                vmem_limit_bytes=vmem_limit,
            ),
            cost_estimate=cost,
        )(nonpad, enc_feats)
        # Tiny combine + matmul/argmax epilogue (runs once; negligible cost).
        acc = acc_parts.sum(axis=0)                                      # (B, C)
        cnt = cnt_parts.sum(axis=0)[:, 0]                                # (B,)
        logits = acc @ length_emb_weight.T                               # (B, L)
        pred_off = jnp.argmax(logits, axis=-1).astype(jnp.int32)
        src_lens = cnt.astype(jnp.int32)
        pred = jnp.clip(pred_off - LENGTH_OFFSET + src_lens, 2, MAX_SEQ_LENGTH)

    real = None
    if tgt_tokens is not None:
        real = jnp.sum(tgt_tokens != PADDING_IDX, axis=1).astype(jnp.int32)
    return pred, real


# ---------------------------------------------------------------------------
# Pure-JAX reference (faithful to the torch op order)
# ---------------------------------------------------------------------------
def reference_forward(enc_feats, src_masks, weight, tgt_tokens):
    nonpad = (~src_masks).T.astype(jnp.float32)                     # (T, B)
    pooled = (enc_feats / nonpad.sum(0)[None, :, None] * nonpad[:, :, None]).sum(0)
    logits = pooled @ weight.T
    src_lens = (~src_masks).astype(jnp.float32).sum(1).astype(jnp.int32)
    pred_off = jnp.argmax(logits, axis=-1).astype(jnp.int32)
    pred = jnp.clip(pred_off - LENGTH_OFFSET + src_lens, 2, MAX_SEQ_LENGTH)
    real = (tgt_tokens != PADDING_IDX).sum(1).astype(jnp.int32)
    return pred, real


if __name__ == "__main__":
    key = jax.random.PRNGKey(0)
    k_enc, k_w, k_tgt = jax.random.split(key, 3)

    T, B, C, S = 19, 2, EMBED_DIM, 8   # T deliberately not a multiple of 8

    enc_feats = jax.random.normal(k_enc, (T, B, C), dtype=jnp.float32)

    # source padding mask (B, T): True = padding. lengths = [19, 11]
    src_lengths = jnp.array([19, 11], dtype=jnp.int32)
    src_masks = jnp.arange(T)[None, :] >= src_lengths[:, None]      # (B, T) bool

    # length embedding weight (max_seq_length, embed_dim)
    length_emb_weight = 0.02 * jax.random.normal(k_w, (MAX_SEQ_LENGTH, C),
                                                 dtype=jnp.float32)

    # target tokens (B, S), padded with PADDING_IDX past tgt_lengths = [8, 5]
    tgt_lengths = jnp.array([8, 5], dtype=jnp.int32)
    tgt_tokens = jax.random.randint(k_tgt, (B, S), 2, 50, dtype=jnp.int32)
    tgt_tokens = jnp.where(jnp.arange(S)[None, :] < tgt_lengths[:, None],
                           tgt_tokens, PADDING_IDX)

    pred_ref, real_ref = reference_forward(enc_feats, src_masks,
                                           length_emb_weight, tgt_tokens)

    # 1) auto tiling / auto split (generation-dependent)
    pred_a, real_a = length_predictor_forward(enc_feats, src_masks,
                                              length_emb_weight, tgt_tokens)
    # 2) forced multi-step streaming on the fused single-core path (cdiv + pad)
    pred_s, real_s = length_predictor_forward(enc_feats, src_masks,
                                              length_emb_weight, tgt_tokens,
                                              t_tile=8, num_splits=1)
    # 3) forced 2-way parallel split (v7x-style megacore path)
    pred_p, real_p = length_predictor_forward(enc_feats, src_masks,
                                              length_emb_weight, tgt_tokens,
                                              t_tile=8, num_splits=2)

    for p, r in ((pred_a, real_a), (pred_s, real_s), (pred_p, real_p)):
        p = jax.block_until_ready(p)
        r = jax.block_until_ready(r)
        assert p.shape == (B,) and r.shape == (B,)
        assert jnp.array_equal(p, pred_ref), (p, pred_ref)
        assert jnp.array_equal(r, real_ref), (r, real_ref)

    print("KERNEL_OK")
</pallas_src>

<mosaic_0001>
module attributes {stable_mosaic.version = 11 : i64} {
  func.func @_fused_kernel(%arg0: i32, %arg1: memref<24x2x1xf32, #tpu.memory_space<vmem>>, %arg2: memref<24x2x32xf32, #tpu.memory_space<vmem>>, %arg3: memref<128x32xf32, #tpu.memory_space<vmem>>, %arg4: memref<1x2xi32, #tpu.memory_space<vmem>>, %arg5: memref<2x32xf32, #tpu.memory_space<vmem>>, %arg6: memref<2x1xf32, #tpu.memory_space<vmem>>) attributes {dimension_semantics = [#tpu.dimension_semantics<arbitrary>], iteration_bounds = array<i64: 1>, scalar_prefetch = 0 : i64, scratch_operands = 2 : i64, tpu.core_type = #tpu.core_type<tc>, window_params = [{transform_indices = @transform_0, window_bounds = array<i64: 24, 2, 1>}, {transform_indices = @transform_1, window_bounds = array<i64: 24, 2, 32>}, {pipeline_mode = #tpu.pipeline_mode<synchronous>, transform_indices = @transform_2, window_bounds = array<i64: 128, 32>}, {pipeline_mode = #tpu.pipeline_mode<synchronous>, transform_indices = @transform_3, window_bounds = array<i64: 1, 2>}]} {
    %c0_i32 = arith.constant 0 : i32
    %0 = arith.cmpi eq, %arg0, %c0_i32 : i32
    %1 = arith.extui %0 : i1 to i32
    %c0_i32_0 = arith.constant 0 : i32
    %2 = arith.cmpi ne, %1, %c0_i32_0 : i32
    scf.if %2 {
      %cst_17 = arith.constant 0.000000e+00 : f32
      %18 = vector.broadcast %cst_17 : f32 to vector<2x32xf32>
      %c0_18 = arith.constant 0 : index
      %c0_19 = arith.constant 0 : index
      %19 = vector.load %arg5[%c0_18, %c0_19] : memref<2x32xf32, #tpu.memory_space<vmem>>, vector<2x32xf32>
      tpu.vector_store %arg5[%c0_18, %c0_19], %18 {strides = array<i32>} : memref<2x32xf32, #tpu.memory_space<vmem>>, vector<2x32xf32>,
      %cst_20 = arith.constant 0.000000e+00 : f32
      %20 = vector.broadcast %cst_20 : f32 to vector<2x1xf32>
      %c0_21 = arith.constant 0 : index
      %c0_22 = arith.constant 0 : index
      %21 = vector.load %arg6[%c0_21, %c0_22] : memref<2x1xf32, #tpu.memory_space<vmem>>, vector<2x1xf32>
      tpu.vector_store %arg6[%c0_21, %c0_22], %20 {strides = array<i32>} : memref<2x1xf32, #tpu.memory_space<vmem>>, vector<2x1xf32>,
    } else {
    }
    %c0 = arith.constant 0 : index
    %c0_1 = arith.constant 0 : index
    %c0_2 = arith.constant 0 : index
    %3 = vector.load %arg1[%c0, %c0_1, %c0_2] : memref<24x2x1xf32, #tpu.memory_space<vmem>>, vector<24x2x1xf32>
    %c0_3 = arith.constant 0 : index
    %c0_4 = arith.constant 0 : index
    %4 = vector.load %arg6[%c0_3, %c0_4] : memref<2x1xf32, #tpu.memory_space<vmem>>, vector<2x1xf32>
    %cst = arith.constant dense<0.000000e+00> : vector<2x1xf32>
    %5 = vector.multi_reduction <add>, %3, %cst [0] : vector<24x2x1xf32> to vector<2x1xf32>
    %6 = arith.addf %4, %5 : vector<2x1xf32>
    %c0_5 = arith.constant 0 : index
    %c0_6 = arith.constant 0 : index
    %7 = vector.load %arg6[%c0_5, %c0_6] : memref<2x1xf32, #tpu.memory_space<vmem>>, vector<2x1xf32>
    tpu.vector_store %arg6[%c0_5, %c0_6], %6 {strides = array<i32>} : memref<2x1xf32, #tpu.memory_space<vmem>>, vector<2x1xf32>,
    %c0_7 = arith.constant 0 : index
    %c0_8 = arith.constant 0 : index
    %8 = vector.load %arg5[%c0_7, %c0_8] : memref<2x32xf32, #tpu.memory_space<vmem>>, vector<2x32xf32>
    %c0_9 = arith.constant 0 : index
    %c0_10 = arith.constant 0 : index
    %c0_11 = arith.constant 0 : index
    %9 = vector.load %arg2[%c0_9, %c0_10, %c0_11] : memref<24x2x32xf32, #tpu.memory_space<vmem>>, vector<24x2x32xf32>
    %10 = vector.broadcast %3 : vector<24x2x1xf32> to vector<24x2x32xf32>
    %11 = arith.mulf %9, %10 : vector<24x2x32xf32>
    %cst_12 = arith.constant dense<0.000000e+00> : vector<2x32xf32>
    %12 = vector.multi_reduction <add>, %11, %cst_12 [0] : vector<24x2x32xf32> to vector<2x32xf32>
    %13 = arith.addf %8, %12 : vector<2x32xf32>
    %c0_13 = arith.constant 0 : index
    %c0_14 = arith.constant 0 : index
    %14 = vector.load %arg5[%c0_13, %c0_14] : memref<2x32xf32, #tpu.memory_space<vmem>>, vector<2x32xf32>
    tpu.vector_store %arg5[%c0_13, %c0_14], %13 {strides = array<i32>} : memref<2x32xf32, #tpu.memory_space<vmem>>, vector<2x32xf32>,
    %c0_i32_15 = arith.constant 0 : i32
    %15 = arith.cmpi eq, %arg0, %c0_i32_15 : i32
    %16 = arith.extui %15 : i1 to i32
    %c0_i32_16 = arith.constant 0 : i32
    %17 = arith.cmpi ne, %16, %c0_i32_16 : i32
    scf.if %17 {
      %c0_17 = arith.constant 0 : index
      %c0_18 = arith.constant 0 : index
      %18 = vector.load %arg5[%c0_17, %c0_18] : memref<2x32xf32, #tpu.memory_space<vmem>>, vector<2x32xf32>
      %c0_19 = arith.constant 0 : index
      %c0_20 = arith.constant 0 : index
      %19 = vector.load %arg3[%c0_19, %c0_20] : memref<128x32xf32, #tpu.memory_space<vmem>>, vector<128x32xf32>
      %cst_21 = arith.constant dense<0.000000e+00> : vector<2x128xf32>
      %20 = tpu.matmul %18, %19, %cst_21 {dimension_numbers = #tpu.dot_dimension_numbers<[1], [1], [0], [0], [0, 0, 1, 0], [], []>} : vector<2x32xf32>, vector<128x32xf32>, vector<2x128xf32> -> vector<2x128xf32>
      %cst_22 = arith.constant dense<0xFF800000> : vector<2xf32>
      %21 = vector.multi_reduction <maximumf>, %20, %cst_22 [1] : vector<2x128xf32> to vector<2xf32>
      %22 = vector.shape_cast %21 : vector<2xf32> to vector<2x1xf32>
      %23 = tpu.iota {dimensions = array<i32: 1>} : vector<2x128xi32>
      %24 = vector.broadcast %22 : vector<2x1xf32> to vector<2x128xf32>
      %25 = arith.cmpf oge, %20, %24 : vector<2x128xf32>
      %c128_i32 = arith.constant 128 : i32
      %26 = vector.broadcast %c128_i32 : i32 to vector<2x128xi32>
      %27 = arith.select %25, %23, %26 : vector<2x128xi1>, vector<2x128xi32>
      %cst_23 = arith.constant dense<2147483647> : vector<2xi32>
      %28 = vector.multi_reduction <minsi>, %27, %cst_23 [1] : vector<2x128xi32> to vector<2xi32>
      %29 = vector.shape_cast %28 : vector<2xi32> to vector<2x1xi32>
      %c0_24 = arith.constant 0 : index
      %c0_25 = arith.constant 0 : index
      %30 = vector.load %arg6[%c0_24, %c0_25] : memref<2x1xf32, #tpu.memory_space<vmem>>, vector<2x1xf32>
      %31 = arith.fptosi %30 : vector<2x1xf32> to vector<2x1xi32>
      %c64_i32 = arith.constant 64 : i32
      %32 = vector.broadcast %c64_i32 : i32 to vector<2x1xi32>
      %33 = arith.subi %29, %32 : vector<2x1xi32>
      %34 = arith.addi %33, %31 : vector<2x1xi32>
      %c2_i32 = arith.constant 2 : i32
      %c128_i32_26 = arith.constant 128 : i32
      %35 = vector.broadcast %c2_i32 : i32 to vector<2x1xi32>
      %36 = arith.maxsi %35, %34 : vector<2x1xi32>
      %37 = vector.broadcast %c128_i32_26 : i32 to vector<2x1xi32>
      %38 = arith.minsi %37, %36 : vector<2x1xi32>
      %39 = tpu.transpose %38, [1, 0] : vector<2x1xi32> -> vector<1x2xi32>
      %c0_27 = arith.constant 0 : index
      %c0_28 = arith.constant 0 : index
      %40 = vector.load %arg4[%c0_27, %c0_28] : memref<1x2xi32, #tpu.memory_space<vmem>>, vector<1x2xi32>
      tpu.vector_store %arg4[%c0_27, %c0_28], %39 {strides = array<i32>} : memref<1x2xi32, #tpu.memory_space<vmem>>, vector<1x2xi32>,
    } else {
    }
    return
  }
  func.func @transform_0(%arg0: i32) -> (i32, i32, i32) {
    %c0_i32 = arith.constant 0 : i32
    %c0_i32_0 = arith.constant 0 : i32
    %c0_i32_1 = arith.constant 0 : i32
    return %arg0, %c0_i32, %c0_i32_0 : i32, i32, i32
  }
  func.func @transform_1(%arg0: i32) -> (i32, i32, i32) {
    %c0_i32 = arith.constant 0 : i32
    %c0_i32_0 = arith.constant 0 : i32
    %c0_i32_1 = arith.constant 0 : i32
    return %arg0, %c0_i32, %c0_i32_0 : i32, i32, i32
  }
  func.func @transform_2(%arg0: i32) -> (i32, i32) {
    %c0_i32 = arith.constant 0 : i32
    %c0_i32_0 = arith.constant 0 : i32
    %c0_i32_1 = arith.constant 0 : i32
    return %c0_i32, %c0_i32_0 : i32, i32
  }
  func.func @transform_3(%arg0: i32) -> (i32, i32) {
    %c0_i32 = arith.constant 0 : i32
    %c0_i32_0 = arith.constant 0 : i32
    %c0_i32_1 = arith.constant 0 : i32
    return %c0_i32, %c0_i32_0 : i32, i32
  }
}

</mosaic_0001>

<llo_original>
// kernel: tpu_custom_call.1
$region0: #{tpu_custom_call.1}
  #allocation0 [shape = 'u32[]', space=smem, size = 0x4, offset = 0x4, fixed_abs, tag = 'smem constant byte address 0x4 - core index']
  #allocation1 [shape = 'u32[72,128]{1,0:T(1,128)}', space=vmem, size = 0x9000, scoped, tag = 'internal scratch']
  #allocation2 [shape = 'f32[2,32]{1,0:T(2,128)}', space=vmem, size = 0x400, scoped, tag = 'scratch operand']
  #allocation3 [shape = 'f32[2,1]{1,0:T(2,128)}', space=vmem, size = 0x400, scoped, tag = 'scratch operand']
  %s0 = inlined_call_operand.vmem [shape: f32[24,2,1], index: 0, kind: input, shape index: {}]
  %s1 = inlined_call_operand.vmem [shape: f32[24,2,32], index: 1, kind: input, shape index: {}]
  %s2 = inlined_call_operand.vmem [shape: f32[128,32], index: 2, kind: input, shape index: {}]
  %s3 = inlined_call_operand.hbm [shape: s32[1,2], index: 3, kind: output, shape index: {}]
  %s4 = sld [smem:[#allocation0]]
  $region30: #{tpu_custom_call.1} parent=0
    _
  %s6 = ssub.s32 1, %s4
  %s7 = scalar_select 0, %s6, %s4
  $region1: #{tpu_custom_call.1} parent=0
    #allocation4 [shape = 'u8[512]{0}', space=vmem, size = 0x400, scoped, tag = 'output window, operand 0, single buffered']
    #allocation5 [shape = 's32[1]{0}', space=sflag, size = 0x4, scoped, tag = 'scoped memory for tpu_custom_call.1']
    %8 = vsyncpa [#allocation5], 0
    // Predicated region
    $region2: #{tpu_custom_call.1} parent=1 // pred_check
      _
    $region3: #{tpu_custom_call.1} parent=1 // pred_check_branch
      %10 = sbr.rel (0) target = $region5
    $region4: #{tpu_custom_call.1} parent=1 // pred_region
      _
    $region5: #{tpu_custom_call.1} parent=1 // pred_fallthru
      _
    // Predicated region
    $region6: #{tpu_custom_call.1} parent=1 // pred_check
      _
    $region7: #{tpu_custom_call.1} parent=1 // pred_check_branch
      %12 = sbr.rel (0) target = $region9
    $region8: #{tpu_custom_call.1} parent=1 // pred_region
      _
    $region9: #{tpu_custom_call.1} parent=1 // pred_fallthru
      _
    // Predicated region
    $region10: #{tpu_custom_call.1} parent=1 // pred_check
      _
    $region11: #{tpu_custom_call.1} parent=1 // pred_check_branch
      %14 = sbr.rel (0) target = $region13
    $region12: #{tpu_custom_call.1} parent=1 // pred_region
      _
    $region13: #{tpu_custom_call.1} parent=1 // pred_fallthru
      _
    %p15 = scmp.eq.s32.totalorder 0, 0
    // Predicated region
    $region14: #{tpu_custom_call.1} parent=1 // pred_check
      %p16 = pneg %p15
    $region15: #{tpu_custom_call.1} parent=1 // pred_check_branch
      %18 = sbr.rel (%p16) target = $region17
    $region16: #{tpu_custom_call.1} parent=1 // pred_region
      %vm19 = vcmask 254976
      %20 = vst.msk [vmem:[#allocation2] sm:$0x3] %vm19, 0.0
      %vm21 = vcmask 1024
      %22 = vst.msk [vmem:[#allocation3] sm:$0x3] %vm21, 0.0
    $region17: #{tpu_custom_call.1} parent=1 // pred_fallthru
      _
    %v23 = vld [vmem:[%s0] sm:$0x3]
    %v24 = vld [vmem:[%s0 + $0x2] sm:$0x3]
    %v25 = vld [vmem:[%s0 + $0x4] sm:$0x3]
    %v26 = vld [vmem:[%s0 + $0x6] sm:$0x3]
    %v27 = vld [vmem:[%s0 + $0x8] sm:$0x3]
    %v28 = vld [vmem:[%s0 + $0xa] sm:$0x3]
    %v29 = vld [vmem:[%s0 + $0xc] sm:$0x3]
    %v30 = vld [vmem:[%s0 + $0xe] sm:$0x3]
    %v31 = vld [vmem:[%s0 + $0x10] sm:$0x3]
    %v32 = vld [vmem:[%s0 + $0x12] sm:$0x3]
    %v33 = vld [vmem:[%s0 + $0x14] sm:$0x3]
    %v34 = vld [vmem:[%s0 + $0x16] sm:$0x3]
    %v35 = vld [vmem:[%s0 + $0x18] sm:$0x3]
    %v36 = vld [vmem:[%s0 + $0x1a] sm:$0x3]
    %v37 = vld [vmem:[%s0 + $0x1c] sm:$0x3]
    %v38 = vld [vmem:[%s0 + $0x1e] sm:$0x3]
    %v39 = vld [vmem:[%s0 + $0x20] sm:$0x3]
    %v40 = vld [vmem:[%s0 + $0x22] sm:$0x3]
    %v41 = vld [vmem:[%s0 + $0x24] sm:$0x3]
    %v42 = vld [vmem:[%s0 + $0x26] sm:$0x3]
    %v43 = vld [vmem:[%s0 + $0x28] sm:$0x3]
    %v44 = vld [vmem:[%s0 + $0x2a] sm:$0x3]
    %v45 = vld [vmem:[%s0 + $0x2c] sm:$0x3]
    %v46 = vld [vmem:[%s0 + $0x2e] sm:$0x3]
    %v47 = vld [vmem:[#allocation3] sm:$0x3]
    %vm48 = vcmask 1024
    %v49 = vsel %vm48, %v23, 0.0
    %v50 = vsel %vm48, %v24, 0.0
    %v51 = vadd.f32 %v49, %v50
    %v52 = vsel %vm48, %v25, 0.0
    %v53 = vadd.f32 %v51, %v52
    %v54 = vsel %vm48, %v26, 0.0
    %v55 = vadd.f32 %v53, %v54
    %v56 = vsel %vm48, %v27, 0.0
    %v57 = vadd.f32 %v55, %v56
    %v58 = vsel %vm48, %v28, 0.0
    %v59 = vadd.f32 %v57, %v58
    %v60 = vsel %vm48, %v29, 0.0
    %v61 = vadd.f32 %v59, %v60
    %v62 = vsel %vm48, %v30, 0.0
    %v63 = vadd.f32 %v61, %v62
    %v64 = vsel %vm48, %v31, 0.0
    %v65 = vadd.f32 %v63, %v64
    %v66 = vsel %vm48, %v32, 0.0
    %v67 = vadd.f32 %v65, %v66
    %v68 = vsel %vm48, %v33, 0.0
    %v69 = vadd.f32 %v67, %v68
    %v70 = vsel %vm48, %v34, 0.0
    %v71 = vadd.f32 %v69, %v70
    %v72 = vsel %vm48, %v35, 0.0
    %v73 = vadd.f32 %v71, %v72
    %v74 = vsel %vm48, %v36, 0.0
    %v75 = vadd.f32 %v73, %v74
    %v76 = vsel %vm48, %v37, 0.0
    %v77 = vadd.f32 %v75, %v76
    %v78 = vsel %vm48, %v38, 0.0
    %v79 = vadd.f32 %v77, %v78
    %v80 = vsel %vm48, %v39, 0.0
    %v81 = vadd.f32 %v79, %v80
    %v82 = vsel %vm48, %v40, 0.0
    %v83 = vadd.f32 %v81, %v82
    %v84 = vsel %vm48, %v41, 0.0
    %v85 = vadd.f32 %v83, %v84
    %v86 = vsel %vm48, %v42, 0.0
    %v87 = vadd.f32 %v85, %v86
    %v88 = vsel %vm48, %v43, 0.0
    %v89 = vadd.f32 %v87, %v88
    %v90 = vsel %vm48, %v44, 0.0
    %v91 = vadd.f32 %v89, %v90
    %v92 = vsel %vm48, %v45, 0.0
    %v93 = vadd.f32 %v91, %v92
    %v94 = vsel %vm48, %v46, 0.0
    %v95 = vadd.f32 %v93, %v94
    %v96 = vadd.f32 %v47, %v95
    %97 = vst.msk [vmem:[#allocation3] sm:$0x3] %vm48, %v96
    %v98 = vld [vmem:[#allocation2] sm:$0x3]
    %v99 = vld [vmem:[%s1] sm:$0x3]
    %v100 = vld [vmem:[%s1 + $0x2] sm:$0x3]
    %v101 = vld [vmem:[%s1 + $0x4] sm:$0x3]
    %v102 = vld [vmem:[%s1 + $0x6] sm:$0x3]
    %v103 = vld [vmem:[%s1 + $0x8] sm:$0x3]
    %v104 = vld [vmem:[%s1 + $0xa] sm:$0x3]
    %v105 = vld [vmem:[%s1 + $0xc] sm:$0x3]
    %v106 = vld [vmem:[%s1 + $0xe] sm:$0x3]
    %v107 = vld [vmem:[%s1 + $0x10] sm:$0x3]
    %v108 = vld [vmem:[%s1 + $0x12] sm:$0x3]
    %v109 = vld [vmem:[%s1 + $0x14] sm:$0x3]
    %v110 = vld [vmem:[%s1 + $0x16] sm:$0x3]
    %v111 = vld [vmem:[%s1 + $0x18] sm:$0x3]
    %v112 = vld [vmem:[%s1 + $0x1a] sm:$0x3]
    %v113 = vld [vmem:[%s1 + $0x1c] sm:$0x3]
    %v114 = vld [vmem:[%s1 + $0x1e] sm:$0x3]
    %v115 = vld [vmem:[%s1 + $0x20] sm:$0x3]
    %v116 = vld [vmem:[%s1 + $0x22] sm:$0x3]
    %v117 = vld [vmem:[%s1 + $0x24] sm:$0x3]
    %v118 = vld [vmem:[%s1 + $0x26] sm:$0x3]
    %v119 = vld [vmem:[%s1 + $0x28] sm:$0x3]
    %v120 = vld [vmem:[%s1 + $0x2a] sm:$0x3]
    %v121 = vld [vmem:[%s1 + $0x2c] sm:$0x3]
    %v122 = vld [vmem:[%s1 + $0x2e] sm:$0x3]
    %124 = vset.pattern.permute.xlu0 0
    %125 = vperm.xlu0 %124, %v23
    %v126 = vpop.permute.xlu0 %125
    %129 = vset.pattern.permute.xlu0 0
    %130 = vperm.xlu0 %129, %v24
    %v131 = vpop.permute.xlu0 %130
    %134 = vset.pattern.permute.xlu0 0
    %135 = vperm.xlu0 %134, %v25
    %v136 = vpop.permute.xlu0 %135
    %139 = vset.pattern.permute.xlu0 0
    %140 = vperm.xlu0 %139, %v26
    %v141 = vpop.permute.xlu0 %140
    %144 = vset.pattern.permute.xlu0 0
    %145 = vperm.xlu0 %144, %v27
    %v146 = vpop.permute.xlu0 %145
    %149 = vset.pattern.permute.xlu0 0
    %150 = vperm.xlu0 %149, %v28
    %v151 = vpop.permute.xlu0 %150
    %154 = vset.pattern.permute.xlu0 0
    %155 = vperm.xlu0 %154, %v29
    %v156 = vpop.permute.xlu0 %155
    %159 = vset.pattern.permute.xlu0 0
    %160 = vperm.xlu0 %159, %v30
    %v161 = vpop.permute.xlu0 %160
    %164 = vset.pattern.permute.xlu0 0
    %165 = vperm.xlu0 %164, %v31
    %v166 = vpop.permute.xlu0 %165
    %169 = vset.pattern.permute.xlu0 0
    %170 = vperm.xlu0 %169, %v32
    %v171 = vpop.permute.xlu0 %170
    %174 = vset.pattern.permute.xlu0 0
    %175 = vperm.xlu0 %174, %v33
    %v176 = vpop.permute.xlu0 %175
    %179 = vset.pattern.permute.xlu0 0
    %180 = vperm.xlu0 %179, %v34
    %v181 = vpop.permute.xlu0 %180
    %184 = vset.pattern.permute.xlu0 0
    %185 = vperm.xlu0 %184, %v35
    %v186 = vpop.permute.xlu0 %185
    %189 = vset.pattern.permute.xlu0 0
    %190 = vperm.xlu0 %189, %v36
    %v191 = vpop.permute.xlu0 %190
    %194 = vset.pattern.permute.xlu0 0
    %195 = vperm.xlu0 %194, %v37
    %v196 = vpop.permute.xlu0 %195
    %199 = vset.pattern.permute.xlu0 0
    %200 = vperm.xlu0 %199, %v38
    %v201 = vpop.permute.xlu0 %200
    %204 = vset.pattern.permute.xlu0 0
    %205 = vperm.xlu0 %204, %v39
    %v206 = vpop.permute.xlu0 %205
    %209 = vset.pattern.permute.xlu0 0
    %210 = vperm.xlu0 %209, %v40
    %v211 = vpop.permute.xlu0 %210
    %214 = vset.pattern.permute.xlu0 0
    %215 = vperm.xlu0 %214, %v41
    %v216 = vpop.permute.xlu0 %215
    %219 = vset.pattern.permute.xlu0 0
    %220 = vperm.xlu0 %219, %v42
    %v221 = vpop.permute.xlu0 %220
    %224 = vset.pattern.permute.xlu0 0
    %225 = vperm.xlu0 %224, %v43
    %v226 = vpop.permute.xlu0 %225
    %229 = vset.pattern.permute.xlu0 0
    %230 = vperm.xlu0 %229, %v44
    %v231 = vpop.permute.xlu0 %230
    %234 = vset.pattern.permute.xlu0 0
    %235 = vperm.xlu0 %234, %v45
    %v236 = vpop.permute.xlu0 %235
    %239 = vset.pattern.permute.xlu0 0
    %240 = vperm.xlu0 %239, %v46
    %v241 = vpop.permute.xlu0 %240
    %v243 = vmul.f32 %v99, %v126
    %v244 = vmul.f32 %v100, %v131
    %v245 = vmul.f32 %v101, %v136
    %v246 = vmul.f32 %v102, %v141
    %v247 = vmul.f32 %v103, %v146
    %v248 = vmul.f32 %v104, %v151
    %v249 = vmul.f32 %v105, %v156
    %v250 = vmul.f32 %v106, %v161
    %v251 = vmul.f32 %v107, %v166
    %v252 = vmul.f32 %v108, %v171
    %v253 = vmul.f32 %v109, %v176
    %v254 = vmul.f32 %v110, %v181
    %v255 = vmul.f32 %v111, %v186
    %v256 = vmul.f32 %v112, %v191
    %v257 = vmul.f32 %v113, %v196
    %v258 = vmul.f32 %v114, %v201
    %v259 = vmul.f32 %v115, %v206
    %v260 = vmul.f32 %v116, %v211
    %v261 = vmul.f32 %v117, %v216
    %v262 = vmul.f32 %v118, %v221
    %v263 = vmul.f32 %v119, %v226
    %v264 = vmul.f32 %v120, %v231
    %v265 = vmul.f32 %v121, %v236
    %v266 = vmul.f32 %v122, %v241
    %vm267 = vcmask 254976
    %v268 = vsel %vm267, %v243, 0.0
    %v269 = vsel %vm267, %v244, 0.0
    %v270 = vadd.f32 %v268, %v269
    %v271 = vsel %vm267, %v245, 0.0
    %v272 = vadd.f32 %v270, %v271
    %v273 = vsel %vm267, %v246, 0.0
    %v274 = vadd.f32 %v272, %v273
    %v275 = vsel %vm267, %v247, 0.0
    %v276 = vadd.f32 %v274, %v275
    %v277 = vsel %vm267, %v248, 0.0
    %v278 = vadd.f32 %v276, %v277
    %v279 = vsel %vm267, %v249, 0.0
    %v280 = vadd.f32 %v278, %v279
    %v281 = vsel %vm267, %v250, 0.0
    %v282 = vadd.f32 %v280, %v281
    %v283 = vsel %vm267, %v251, 0.0
    %v284 = vadd.f32 %v282, %v283
    %v285 = vsel %vm267, %v252, 0.0
    %v286 = vadd.f32 %v284, %v285
    %v287 = vsel %vm267, %v253, 0.0
    %v288 = vadd.f32 %v286, %v287
    %v289 = vsel %vm267, %v254, 0.0
    %v290 = vadd.f32 %v288, %v289
    %v291 = vsel %vm267, %v255, 0.0
    %v292 = vadd.f32 %v290, %v291
    %v293 = vsel %vm267, %v256, 0.0
    %v294 = vadd.f32 %v292, %v293
    %v295 = vsel %vm267, %v257, 0.0
    %v296 = vadd.f32 %v294, %v295
    %v297 = vsel %vm267, %v258, 0.0
    %v298 = vadd.f32 %v296, %v297
    %v299 = vsel %vm267, %v259, 0.0
    %v300 = vadd.f32 %v298, %v299
    %v301 = vsel %vm267, %v260, 0.0
    %v302 = vadd.f32 %v300, %v301
    %v303 = vsel %vm267, %v261, 0.0
    %v304 = vadd.f32 %v302, %v303
    %v305 = vsel %vm267, %v262, 0.0
    %v306 = vadd.f32 %v304, %v305
    %v307 = vsel %vm267, %v263, 0.0
    %v308 = vadd.f32 %v306, %v307
    %v309 = vsel %vm267, %v264, 0.0
    %v310 = vadd.f32 %v308, %v309
    %v311 = vsel %vm267, %v265, 0.0
    %v312 = vadd.f32 %v310, %v311
    %v313 = vsel %vm267, %v266, 0.0
    %v314 = vadd.f32 %v312, %v313
    %v315 = vadd.f32 %v98, %v314
    %316 = vst.msk [vmem:[#allocation2] sm:$0x3] %vm267, %v315
    // Predicated region
    $region18: #{tpu_custom_call.1} parent=1 // pred_check
      %p317 = pneg %p15
    $region19: #{tpu_custom_call.1} parent=1 // pred_check_branch
      %319 = sbr.rel (%p317) target = $region21
    $region20: #{tpu_custom_call.1} parent=1 // pred_region
      %v320 = vld [vmem:[#allocation2] sm:$0x3]
      %v321 = vld [vmem:[%s2] sm:$0xff]
      %v322 = vld [vmem:[%s2 + $0x8] sm:$0xff]
      %v323 = vld [vmem:[%s2 + $0x10] sm:$0xff]
      %v324 = vld [vmem:[%s2 + $0x18] sm:$0xff]
      %v325 = vld [vmem:[%s2 + $0x20] sm:$0xff]
      %v326 = vld [vmem:[%s2 + $0x28] sm:$0xff]
      %v327 = vld [vmem:[%s2 + $0x30] sm:$0xff]
      %v328 = vld [vmem:[%s2 + $0x38] sm:$0xff]
      %v329 = vld [vmem:[%s2 + $0x40] sm:$0xff]
      %v330 = vld [vmem:[%s2 + $0x48] sm:$0xff]
      %v331 = vld [vmem:[%s2 + $0x50] sm:$0xff]
      %v332 = vld [vmem:[%s2 + $0x58] sm:$0xff]
      %v333 = vld [vmem:[%s2 + $0x60] sm:$0xff]
      %v334 = vld [vmem:[%s2 + $0x68] sm:$0xff]
      %v335 = vld [vmem:[%s2 + $0x70] sm:$0xff]
      %v336 = vld [vmem:[%s2 + $0x78] sm:$0xff]
      %vm337 = vcmask 261120
      %v339 = vsel %vm337, %v320, 0
      %v342 = vsel %vm337, %v321, 0
      %v345 = vsel %vm337, %v322, 0
      %v348 = vsel %vm337, %v323, 0
      %v351 = vsel %vm337, %v324, 0
      %v354 = vsel %vm337, %v325, 0
      %v357 = vsel %vm337, %v326, 0
      %v360 = vsel %vm337, %v327, 0
      %v363 = vsel %vm337, %v328, 0
      %v366 = vsel %vm337, %v329, 0
      %v369 = vsel %vm337, %v330, 0
      %v372 = vsel %vm337, %v331, 0
      %v375 = vsel %vm337, %v332, 0
      %v378 = vsel %vm337, %v333, 0
      %v381 = vsel %vm337, %v334, 0
      %v384 = vsel %vm337, %v335, 0
      %v387 = vsel %vm337, %v336, 0
      %389 = vmatpush.xpose.msra.mxu0 %v387
      %390 = vmatpush.xpose.msra.mxu0 %v384
      %391 = vmatpush.xpose.msra.mxu0 %v381
      %392 = vmatpush.xpose.msra.mxu0 %v378
      %393 = vmatpush.xpose.msra.mxu0 %v375
      %394 = vmatpush.xpose.msra.mxu0 %v372
      %395 = vmatpush.xpose.msra.mxu0 %v369
      %396 = vmatpush.xpose.msra.mxu0 %v366
      %397 = vmatpush.xpose.msra.mxu0 %v363
      %398 = vmatpush.xpose.msra.mxu0 %v360
      %399 = vmatpush.xpose.msra.mxu0 %v357
      %400 = vmatpush.xpose.msra.mxu0 %v354
      %401 = vmatpush.xpose.msra.mxu0 %v351
      %402 = vmatpush.xpose.msra.mxu0 %v348
      %403 = vmatpush.xpose.msra.mxu0 %v345
      %404 = vmatpush.xpose.msra.mxu0 %v342
      %405 = vmatmul.f32.gmra.mxu0 %v339
      %v406 = vpop.f32.mrf.mxu0
      %v407 = vadd.f32 0.0, %v406
      %408 = vdwg.mxu0
      %vm409 = vcmask 1041408
      %v410 = vsel %vm409, %v407, -inf
      %411 = vmax.xlane.f32.xlu0 %v410
      %v412 = vpop.xlane.xlu0 %411
      %v413 = vlaneseq
      %v414 = vand.u32 %v413, 127
      %vm415 = vcmp.ge.f32.partialorder %v407, %v412
      %v416 = vsel %vm415, %v414, 128
      %v417 = vsel %vm409, %v416, 2147483647
      %v418 = vand.u32 %v417, 65535
      %v419 = vshra.s32 %v417, 16
      %v420 = vcvt.s32.f32 %v418
      %v421 = vcvt.s32.f32 %v419
      %422 = vmin.xlane.f32.xlu0 %v421
      %v423 = vpop.xlane.xlu0 %422
      %vm424 = vcmp.eq.f32.partialorder %v421, %v423
      %v425 = vsel %vm424, %v420, inf
      %426 = vmin.xlane.f32.xlu0 %v425
      %v427 = vpop.xlane.xlu0 %426
      %v428 = vcvt.f32.s32 %v427
      %v429 = vcvt.f32.s32 %v423
      %v430 = vshll.u32 %v429, 16
      %v431 = vadd.s32 %v430, %v428
      %v432 = vld [vmem:[#allocation3] sm:$0x3]
      %v433 = vcvt.f32.s32.to.zero.pseudo %v432
      %v434 = vsub.s32 %v431, 64
      %v435 = vadd.s32 %v434, %v433
      %vm436 = vcmp.gt.s32.totalorder %v435, 2
      %v437 = vsel %vm436, %v435, 2
      %vm438 = vcmp.lt.s32.totalorder %v437, 128
      %v439 = vsel %vm438, %v437, 128
      %440 = vxpose.xlu0.b32.start [1/16] %v439, 128
      %441 = vxpose.xlu0.b32.cont [2/16] 0, 128
      %442 = vxpose.xlu0.b32.cont [3/16] 0, 128
      %443 = vxpose.xlu0.b32.cont [4/16] 0, 128
      %444 = vxpose.xlu0.b32.cont [5/16] 0, 128
      %445 = vxpose.xlu0.b32.cont [6/16] 0, 128
      %446 = vxpose.xlu0.b32.cont [7/16] 0, 128
      %447 = vxpose.xlu0.b32.cont [8/16] 0, 128
      %448 = vxpose.xlu0.b32.cont [9/16] 0, 128
      %449 = vxpose.xlu0.b32.cont [10/16] 0, 128
      %450 = vxpose.xlu0.b32.cont [11/16] 0, 128
      %451 = vxpose.xlu0.b32.cont [12/16] 0, 128
      %452 = vxpose.xlu0.b32.cont [13/16] 0, 128
      %453 = vxpose.xlu0.b32.cont [14/16] 0, 128
      %454 = vxpose.xlu0.b32.cont [15/16] 0, 128
      %455 = vxpose.xlu0.b32.end [16/16] 0, 128
      %v456 = vpop.trf.xlu0
      %v457 = vpop.trf.xlu0
      %v458 = vpop.trf.xlu0
      %v459 = vpop.trf.xlu0
      %v460 = vpop.trf.xlu0
      %v461 = vpop.trf.xlu0
      %v462 = vpop.trf.xlu0
      %v463 = vpop.trf.xlu0
      %v464 = vpop.trf.xlu0
      %v465 = vpop.trf.xlu0
      %v466 = vpop.trf.xlu0
      %v467 = vpop.trf.xlu0
      %v468 = vpop.trf.xlu0
      %v469 = vpop.trf.xlu0
      %v470 = vpop.trf.xlu0
      %v471 = vpop.trf.xlu0
      %vm472 = vcmask 8192
      %473 = vst.msk [vmem:[#allocation4] sm:$0x1] %vm472, %v456
    $region21: #{tpu_custom_call.1} parent=1 // pred_fallthru
      _
    // Predicated region
    $region22: #{tpu_custom_call.1} parent=1 // pred_check
      _
    $region23: #{tpu_custom_call.1} parent=1 // pred_check_branch
      %475 = sbr.rel (0) target = $region25
    $region24: #{tpu_custom_call.1} parent=1 // pred_region
      %477 = vsyncadd [#allocation5], 0
      %s479 = sshll.u32 [#allocation4], 4
      %s480 = int_to_ptr.vmem [resolvable:$true] %s479
      %s481 = sshll.u32 %s3, 4
      %s482 = int_to_ptr.hbm [resolvable:$true] %s481
      %484 = dma.vmem_to_hbm [thread:$0]  %s480, 16, %s482, [#allocation5]
    $region25: #{tpu_custom_call.1} parent=1 // pred_fallthru
      _
    // Predicated region
    $region26: #{tpu_custom_call.1} parent=1 // pred_check
      _
    $region27: #{tpu_custom_call.1} parent=1 // pred_check_branch
      %486 = sbr.rel (0) target = $region29
    $region28: #{tpu_custom_call.1} parent=1 // pred_region
      %488 = dma.done [#allocation5], 16
    $region29: #{tpu_custom_call.1} parent=1 // pred_fallthru
      _
    %489 = vsyncpa [#allocation5], 1

</llo_original>
